<compile_context>
chip_gen: v5e
topology: v5e:2x2
jax: 0.10.0
libtpu: 0.0.40
codegen_flags: <defaults>
</compile_context>

<pallas_src>
import jax
import jax.numpy as jnp
from jax.experimental import pallas as pl
from jax.experimental.pallas import tpu as pltpu

LANE = 128


def _round_up(n, m):
    return ((n + m - 1) // m) * m


def mlp_kernel(x_ref,
               w1_ref, b1_ref,
               w2_ref, b2_ref,
               w3_ref, b3_ref,
               w4_ref, b4_ref,
               wf_ref, bf_ref,
               out_ref):
    """Fused MLP forward for one batch tile (weights resident in VMEM)."""

    def lin_relu(h_bf16, w_ref, b_ref):
        # bf16 operands -> MXU, f32 accumulate; BN already folded into w/b.
        z = jnp.dot(h_bf16, w_ref[...], preferred_element_type=jnp.float32)
        z = z + b_ref[...]
        return jnp.maximum(z, 0.0).astype(jnp.bfloat16)  # ReLU, bf16 for next dot

    h = x_ref[...].astype(jnp.bfloat16)
    h = lin_relu(h, w1_ref, b1_ref)
    h = lin_relu(h, w2_ref, b2_ref)
    h = lin_relu(h, w3_ref, b3_ref)
    h = lin_relu(h, w4_ref, b4_ref)
    z = jnp.dot(h, wf_ref[...], preferred_element_type=jnp.float32) + bf_ref[...]
    # Sigmoid on the EUP: exp + approximate reciprocal (clip guards approx overshoot).
    e = jnp.exp(-z)
    p = pl.reciprocal(1.0 + e, approx=True)
    out_ref[...] = jnp.clip(p, 0.0, 1.0)


def fold_bn(fc_bias, gamma, beta, running_mean, running_var, eps=1e-5):
    """Fold Linear bias + inference-mode BatchNorm1d into per-feature scale/shift.

    y = gamma * (W x + b - mean) / sqrt(var + eps) + beta = (W x) * scale + shift
    """
    scale = gamma / jnp.sqrt(running_var + eps)
    shift = (fc_bias - running_mean) * scale + beta
    return scale, shift


def init_params(key, input_features, hidden_dim, num_classes):
    """Deterministic synthetic parameters (shapes follow nn.Linear / BatchNorm1d)."""
    ks = iter(jax.random.split(key, 26))

    def linear(fan_in, fan_out):
        kw, kb = next(ks), next(ks)
        w = jax.random.normal(kw, (fan_in, fan_out), jnp.float32) / jnp.sqrt(fan_in)
        b = jax.random.normal(kb, (fan_out,), jnp.float32) * 0.01
        return w, b

    def bn(dim):
        kg, kb, km, kv = next(ks), next(ks), next(ks), next(ks)
        gamma = 1.0 + 0.1 * jax.random.normal(kg, (dim,), jnp.float32)
        beta = 0.1 * jax.random.normal(kb, (dim,), jnp.float32)
        mean = 0.05 * jax.random.normal(km, (dim,), jnp.float32)
        var = jnp.abs(jax.random.normal(kv, (dim,), jnp.float32)) + 1.0
        return gamma, beta, mean, var

    out = []
    fan_in = input_features
    for _ in range(4):
        w, fb = linear(fan_in, hidden_dim)
        s, b = fold_bn(fb, *bn(hidden_dim))
        out += [w, s, b]
        fan_in = hidden_dim
    wf, fbf = linear(hidden_dim, num_classes)
    out += [wf, fbf]
    return tuple(out)


def fuse_and_pad_params(params, input_features, hidden_dim, num_classes):
    """Fold BN scale into weight columns and zero-pad to lane-dense shapes.

    Weights -> bf16 with fan_in/fan_out padded to multiples of 128 (padded rows
    and columns are 0).  Shifts pad with 0, so padded hidden units are exactly
    0 after ReLU and never affect real outputs.
    """
    F_pad = _round_up(input_features, LANE)
    H_pad = _round_up(hidden_dim, LANE)
    C_pad = _round_up(num_classes, LANE)

    (w1, s1, b1, w2, s2, b2, w3, s3, b3, w4, s4, b4, wf, fbf) = params

    def pad_fused_w(w, scale, rows, cols):
        w_fused = w * scale[None, :]                       # fold BN scale (f32)
        out = jnp.zeros((rows, cols), jnp.float32)
        out = out.at[:w_fused.shape[0], :w_fused.shape[1]].set(w_fused)
        return out.astype(jnp.bfloat16)

    def pad_shift(b, cols):
        return jnp.zeros((1, cols), jnp.float32).at[0, :b.shape[0]].set(b)

    def pad_w(w, rows, cols):
        out = jnp.zeros((rows, cols), jnp.float32)
        out = out.at[:w.shape[0], :w.shape[1]].set(w)
        return out.astype(jnp.bfloat16)

    return (
        pad_fused_w(w1, s1, F_pad, H_pad), pad_shift(b1, H_pad),
        pad_fused_w(w2, s2, H_pad, H_pad), pad_shift(b2, H_pad),
        pad_fused_w(w3, s3, H_pad, H_pad), pad_shift(b3, H_pad),
        pad_fused_w(w4, s4, H_pad, H_pad), pad_shift(b4, H_pad),
        pad_w(wf, H_pad, C_pad), pad_shift(fbf, C_pad),
    )


def simple_mlp_forward(x_nchw, padded_params, num_classes):
    (w1, b1, w2, b2, w3, b3, w4, b4, wf, bf) = padded_params

    B = x_nchw.shape[0]
    xf = x_nchw.reshape(B, -1).astype(jnp.float32)    # same as torch x.reshape(B, -1)
    F = xf.shape[1]
    F_pad = w1.shape[0]
    H_pad = w1.shape[1]
    C_pad = wf.shape[1]

    # Batch tile: 128 rows once batched up, minimum 8 (sublane) for tiny batches.
    TB = 128 if B >= 128 else 8
    B_pad = _round_up(B, TB)
    x_pad = jnp.zeros((B_pad, F_pad), jnp.float32).at[:B, :F].set(xf)
    n_tiles = B_pad // TB

    def resident(arr):
        # Constant block index -> DMA'd once, stays in VMEM across the grid.
        return pl.BlockSpec(arr.shape, lambda i: (0, 0))

    weight_specs = [resident(p) for p in padded_params]

    flops = 2 * B_pad * (F_pad * H_pad + 3 * H_pad * H_pad + H_pad * C_pad)
    bytes_accessed = int(
        x_pad.size * 4
        + sum(int(p.size) * int(p.dtype.itemsize) for p in padded_params)
        + B_pad * C_pad * 4
    )

    out = pl.pallas_call(
        mlp_kernel,
        out_shape=jax.ShapeDtypeStruct((B_pad, C_pad), jnp.float32),
        grid_spec=pltpu.PrefetchScalarGridSpec(
            num_scalar_prefetch=0,
            grid=(n_tiles,),
            in_specs=[pl.BlockSpec((TB, F_pad), lambda i: (i, 0))] + weight_specs,
            out_specs=pl.BlockSpec((TB, C_pad), lambda i: (i, 0)),
        ),
        compiler_params=pltpu.CompilerParams(
            dimension_semantics=("parallel",)),
        cost_estimate=pl.CostEstimate(
            flops=int(flops),
            transcendentals=int(B_pad * C_pad),
            bytes_accessed=bytes_accessed),
    )(x_pad, *padded_params)

    y = out[:B, :num_classes]                         # drop batch / lane padding
    return y, y                                       # module returns (x, x)


def reference_forward(x_nchw, params):
    """Plain-JAX f32 reference with identical semantics (inference BN folded)."""
    (w1, s1, b1, w2, s2, b2, w3, s3, b3, w4, s4, b4, wf, fbf) = params
    h = x_nchw.reshape(x_nchw.shape[0], -1).astype(jnp.float32)
    for w, s, b in ((w1, s1, b1), (w2, s2, b2), (w3, s3, b3), (w4, s4, b4)):
        h = jnp.maximum(h @ w * s + b, 0.0)
    return jax.nn.sigmoid(h @ wf + fbf)


if __name__ == "__main__":
    key = jax.random.PRNGKey(0)
    k_x, k_p = jax.random.split(key)

    # Small CIFAR-like input: batch=2, channels=4, spatial=16x16 (NCHW).
    B, C, H, W = 2, 4, 16, 16
    hidden_dim = 32
    num_classes = 1
    input_features = C * H * W

    x = jax.random.normal(k_x, (B, C, H, W), jnp.float32)
    params = init_params(k_p, input_features, hidden_dim, num_classes)
    padded = fuse_and_pad_params(params, input_features, hidden_dim, num_classes)

    out1, out2 = simple_mlp_forward(x, padded, num_classes)
    jax.block_until_ready(out1)

    assert out1.shape == (B, num_classes)
    assert bool(jnp.all((out1 >= 0.0) & (out1 <= 1.0)))

    ref = reference_forward(x, params)
    assert bool(jnp.all(jnp.abs(out1 - ref) < 5e-2)), "mismatch vs f32 reference"

    print("KERNEL_OK")
</pallas_src>

<mosaic_0001>
module attributes {stable_mosaic.version = 11 : i64} {
  func.func @mlp_kernel(%arg0: i32, %arg1: memref<8x1024xf32, #tpu.memory_space<vmem>>, %arg2: memref<1024x128xbf16, #tpu.memory_space<vmem>>, %arg3: memref<1x128xf32, #tpu.memory_space<vmem>>, %arg4: memref<128x128xbf16, #tpu.memory_space<vmem>>, %arg5: memref<1x128xf32, #tpu.memory_space<vmem>>, %arg6: memref<128x128xbf16, #tpu.memory_space<vmem>>, %arg7: memref<1x128xf32, #tpu.memory_space<vmem>>, %arg8: memref<128x128xbf16, #tpu.memory_space<vmem>>, %arg9: memref<1x128xf32, #tpu.memory_space<vmem>>, %arg10: memref<128x128xbf16, #tpu.memory_space<vmem>>, %arg11: memref<1x128xf32, #tpu.memory_space<vmem>>, %arg12: memref<8x128xf32, #tpu.memory_space<vmem>>) attributes {dimension_semantics = [#tpu.dimension_semantics<parallel>], iteration_bounds = array<i64: 1>, scalar_prefetch = 0 : i64, scratch_operands = 0 : i64, tpu.core_type = #tpu.core_type<tc>, window_params = [{transform_indices = @transform_0, window_bounds = array<i64: 8, 1024>}, {pipeline_mode = #tpu.pipeline_mode<synchronous>, transform_indices = @transform_1, window_bounds = array<i64: 1024, 128>}, {pipeline_mode = #tpu.pipeline_mode<synchronous>, transform_indices = @transform_2, window_bounds = array<i64: 1, 128>}, {pipeline_mode = #tpu.pipeline_mode<synchronous>, transform_indices = @transform_3, window_bounds = array<i64: 128, 128>}, {pipeline_mode = #tpu.pipeline_mode<synchronous>, transform_indices = @transform_4, window_bounds = array<i64: 1, 128>}, {pipeline_mode = #tpu.pipeline_mode<synchronous>, transform_indices = @transform_5, window_bounds = array<i64: 128, 128>}, {pipeline_mode = #tpu.pipeline_mode<synchronous>, transform_indices = @transform_6, window_bounds = array<i64: 1, 128>}, {pipeline_mode = #tpu.pipeline_mode<synchronous>, transform_indices = @transform_7, window_bounds = array<i64: 128, 128>}, {pipeline_mode = #tpu.pipeline_mode<synchronous>, transform_indices = @transform_8, window_bounds = array<i64: 1, 128>}, {pipeline_mode = #tpu.pipeline_mode<synchronous>, transform_indices = @transform_9, window_bounds = array<i64: 128, 128>}, {pipeline_mode = #tpu.pipeline_mode<synchronous>, transform_indices = @transform_10, window_bounds = array<i64: 1, 128>}, {transform_indices = @transform_11, window_bounds = array<i64: 8, 128>}]} {
    %c0 = arith.constant 0 : index
    %c0_0 = arith.constant 0 : index
    %0 = vector.load %arg1[%c0, %c0_0] : memref<8x1024xf32, #tpu.memory_space<vmem>>, vector<8x1024xf32>
    %1 = arith.truncf %0 : vector<8x1024xf32> to vector<8x1024xbf16>
    %c0_1 = arith.constant 0 : index
    %c0_2 = arith.constant 0 : index
    %2 = vector.load %arg2[%c0_1, %c0_2] : memref<1024x128xbf16, #tpu.memory_space<vmem>>, vector<1024x128xbf16>
    %cst = arith.constant dense<0.000000e+00> : vector<8x128xf32>
    %3 = tpu.matmul %1, %2, %cst {dimension_numbers = #tpu.dot_dimension_numbers<[1], [0], [0], [1], [0, 0, 1, 1], [], []>} : vector<8x1024xbf16>, vector<1024x128xbf16>, vector<8x128xf32> -> vector<8x128xf32>
    %c0_3 = arith.constant 0 : index
    %c0_4 = arith.constant 0 : index
    %4 = vector.load %arg3[%c0_3, %c0_4] : memref<1x128xf32, #tpu.memory_space<vmem>>, vector<1x128xf32>
    %5 = vector.broadcast %4 : vector<1x128xf32> to vector<8x128xf32>
    %6 = arith.addf %3, %5 : vector<8x128xf32>
    %cst_5 = arith.constant 0.000000e+00 : f32
    %7 = vector.broadcast %cst_5 : f32 to vector<8x128xf32>
    %8 = arith.maximumf %6, %7 : vector<8x128xf32>
    %9 = arith.truncf %8 : vector<8x128xf32> to vector<8x128xbf16>
    %c0_6 = arith.constant 0 : index
    %c0_7 = arith.constant 0 : index
    %10 = vector.load %arg4[%c0_6, %c0_7] : memref<128x128xbf16, #tpu.memory_space<vmem>>, vector<128x128xbf16>
    %cst_8 = arith.constant dense<0.000000e+00> : vector<8x128xf32>
    %11 = tpu.matmul %9, %10, %cst_8 {dimension_numbers = #tpu.dot_dimension_numbers<[1], [0], [0], [1], [0, 0, 1, 1], [], []>} : vector<8x128xbf16>, vector<128x128xbf16>, vector<8x128xf32> -> vector<8x128xf32>
    %c0_9 = arith.constant 0 : index
    %c0_10 = arith.constant 0 : index
    %12 = vector.load %arg5[%c0_9, %c0_10] : memref<1x128xf32, #tpu.memory_space<vmem>>, vector<1x128xf32>
    %13 = vector.broadcast %12 : vector<1x128xf32> to vector<8x128xf32>
    %14 = arith.addf %11, %13 : vector<8x128xf32>
    %cst_11 = arith.constant 0.000000e+00 : f32
    %15 = vector.broadcast %cst_11 : f32 to vector<8x128xf32>
    %16 = arith.maximumf %14, %15 : vector<8x128xf32>
    %17 = arith.truncf %16 : vector<8x128xf32> to vector<8x128xbf16>
    %c0_12 = arith.constant 0 : index
    %c0_13 = arith.constant 0 : index
    %18 = vector.load %arg6[%c0_12, %c0_13] : memref<128x128xbf16, #tpu.memory_space<vmem>>, vector<128x128xbf16>
    %cst_14 = arith.constant dense<0.000000e+00> : vector<8x128xf32>
    %19 = tpu.matmul %17, %18, %cst_14 {dimension_numbers = #tpu.dot_dimension_numbers<[1], [0], [0], [1], [0, 0, 1, 1], [], []>} : vector<8x128xbf16>, vector<128x128xbf16>, vector<8x128xf32> -> vector<8x128xf32>
    %c0_15 = arith.constant 0 : index
    %c0_16 = arith.constant 0 : index
    %20 = vector.load %arg7[%c0_15, %c0_16] : memref<1x128xf32, #tpu.memory_space<vmem>>, vector<1x128xf32>
    %21 = vector.broadcast %20 : vector<1x128xf32> to vector<8x128xf32>
    %22 = arith.addf %19, %21 : vector<8x128xf32>
    %cst_17 = arith.constant 0.000000e+00 : f32
    %23 = vector.broadcast %cst_17 : f32 to vector<8x128xf32>
    %24 = arith.maximumf %22, %23 : vector<8x128xf32>
    %25 = arith.truncf %24 : vector<8x128xf32> to vector<8x128xbf16>
    %c0_18 = arith.constant 0 : index
    %c0_19 = arith.constant 0 : index
    %26 = vector.load %arg8[%c0_18, %c0_19] : memref<128x128xbf16, #tpu.memory_space<vmem>>, vector<128x128xbf16>
    %cst_20 = arith.constant dense<0.000000e+00> : vector<8x128xf32>
    %27 = tpu.matmul %25, %26, %cst_20 {dimension_numbers = #tpu.dot_dimension_numbers<[1], [0], [0], [1], [0, 0, 1, 1], [], []>} : vector<8x128xbf16>, vector<128x128xbf16>, vector<8x128xf32> -> vector<8x128xf32>
    %c0_21 = arith.constant 0 : index
    %c0_22 = arith.constant 0 : index
    %28 = vector.load %arg9[%c0_21, %c0_22] : memref<1x128xf32, #tpu.memory_space<vmem>>, vector<1x128xf32>
    %29 = vector.broadcast %28 : vector<1x128xf32> to vector<8x128xf32>
    %30 = arith.addf %27, %29 : vector<8x128xf32>
    %cst_23 = arith.constant 0.000000e+00 : f32
    %31 = vector.broadcast %cst_23 : f32 to vector<8x128xf32>
    %32 = arith.maximumf %30, %31 : vector<8x128xf32>
    %33 = arith.truncf %32 : vector<8x128xf32> to vector<8x128xbf16>
    %c0_24 = arith.constant 0 : index
    %c0_25 = arith.constant 0 : index
    %34 = vector.load %arg10[%c0_24, %c0_25] : memref<128x128xbf16, #tpu.memory_space<vmem>>, vector<128x128xbf16>
    %cst_26 = arith.constant dense<0.000000e+00> : vector<8x128xf32>
    %35 = tpu.matmul %33, %34, %cst_26 {dimension_numbers = #tpu.dot_dimension_numbers<[1], [0], [0], [1], [0, 0, 1, 1], [], []>} : vector<8x128xbf16>, vector<128x128xbf16>, vector<8x128xf32> -> vector<8x128xf32>
    %c0_27 = arith.constant 0 : index
    %c0_28 = arith.constant 0 : index
    %36 = vector.load %arg11[%c0_27, %c0_28] : memref<1x128xf32, #tpu.memory_space<vmem>>, vector<1x128xf32>
    %37 = vector.broadcast %36 : vector<1x128xf32> to vector<8x128xf32>
    %38 = arith.addf %35, %37 : vector<8x128xf32>
    %cst_29 = arith.constant 0.000000e+00 : f32
    %39 = vector.broadcast %cst_29 : f32 to vector<8x128xf32>
    %40 = arith.subf %39, %38 : vector<8x128xf32>
    %41 = math.exp %40 : vector<8x128xf32>
    %cst_30 = arith.constant 1.000000e+00 : f32
    %42 = vector.broadcast %cst_30 : f32 to vector<8x128xf32>
    %43 = arith.addf %42, %41 : vector<8x128xf32>
    %44 = tpu.reciprocal %43 {approx = true} : vector<8x128xf32> -> vector<8x128xf32>
    %cst_31 = arith.constant 0.000000e+00 : f32
    %cst_32 = arith.constant 1.000000e+00 : f32
    %45 = vector.broadcast %cst_31 : f32 to vector<8x128xf32>
    %46 = arith.maximumf %45, %44 : vector<8x128xf32>
    %47 = vector.broadcast %cst_32 : f32 to vector<8x128xf32>
    %48 = arith.minimumf %47, %46 : vector<8x128xf32>
    %c0_33 = arith.constant 0 : index
    %c0_34 = arith.constant 0 : index
    %49 = vector.load %arg12[%c0_33, %c0_34] : memref<8x128xf32, #tpu.memory_space<vmem>>, vector<8x128xf32>
    tpu.vector_store %arg12[%c0_33, %c0_34], %48 {strides = array<i32>} : memref<8x128xf32, #tpu.memory_space<vmem>>, vector<8x128xf32>,
    return
  }
  func.func @transform_0(%arg0: i32) -> (i32, i32) {
    %c0_i32 = arith.constant 0 : i32
    %c0_i32_0 = arith.constant 0 : i32
    return %arg0, %c0_i32 : i32, i32
  }
  func.func @transform_1(%arg0: i32) -> (i32, i32) {
    %c0_i32 = arith.constant 0 : i32
    %c0_i32_0 = arith.constant 0 : i32
    %c0_i32_1 = arith.constant 0 : i32
    return %c0_i32, %c0_i32_0 : i32, i32
  }
  func.func @transform_2(%arg0: i32) -> (i32, i32) {
    %c0_i32 = arith.constant 0 : i32
    %c0_i32_0 = arith.constant 0 : i32
    %c0_i32_1 = arith.constant 0 : i32
    return %c0_i32, %c0_i32_0 : i32, i32
  }
  func.func @transform_3(%arg0: i32) -> (i32, i32) {
    %c0_i32 = arith.constant 0 : i32
    %c0_i32_0 = arith.constant 0 : i32
    %c0_i32_1 = arith.constant 0 : i32
    return %c0_i32, %c0_i32_0 : i32, i32
  }
  func.func @transform_4(%arg0: i32) -> (i32, i32) {
    %c0_i32 = arith.constant 0 : i32
    %c0_i32_0 = arith.constant 0 : i32
    %c0_i32_1 = arith.constant 0 : i32
    return %c0_i32, %c0_i32_0 : i32, i32
  }
  func.func @transform_5(%arg0: i32) -> (i32, i32) {
    %c0_i32 = arith.constant 0 : i32
    %c0_i32_0 = arith.constant 0 : i32
    %c0_i32_1 = arith.constant 0 : i32
    return %c0_i32, %c0_i32_0 : i32, i32
  }
  func.func @transform_6(%arg0: i32) -> (i32, i32) {
    %c0_i32 = arith.constant 0 : i32
    %c0_i32_0 = arith.constant 0 : i32
    %c0_i32_1 = arith.constant 0 : i32
    return %c0_i32, %c0_i32_0 : i32, i32
  }
  func.func @transform_7(%arg0: i32) -> (i32, i32) {
    %c0_i32 = arith.constant 0 : i32
    %c0_i32_0 = arith.constant 0 : i32
    %c0_i32_1 = arith.constant 0 : i32
    return %c0_i32, %c0_i32_0 : i32, i32
  }
  func.func @transform_8(%arg0: i32) -> (i32, i32) {
    %c0_i32 = arith.constant 0 : i32
    %c0_i32_0 = arith.constant 0 : i32
    %c0_i32_1 = arith.constant 0 : i32
    return %c0_i32, %c0_i32_0 : i32, i32
  }
  func.func @transform_9(%arg0: i32) -> (i32, i32) {
    %c0_i32 = arith.constant 0 : i32
    %c0_i32_0 = arith.constant 0 : i32
    %c0_i32_1 = arith.constant 0 : i32
    return %c0_i32, %c0_i32_0 : i32, i32
  }
  func.func @transform_10(%arg0: i32) -> (i32, i32) {
    %c0_i32 = arith.constant 0 : i32
    %c0_i32_0 = arith.constant 0 : i32
    %c0_i32_1 = arith.constant 0 : i32
    return %c0_i32, %c0_i32_0 : i32, i32
  }
  func.func @transform_11(%arg0: i32) -> (i32, i32) {
    %c0_i32 = arith.constant 0 : i32
    %c0_i32_0 = arith.constant 0 : i32
    return %arg0, %c0_i32 : i32, i32
  }
}

</mosaic_0001>

<llo_original>
// kernel: tpu_custom_call.1
$region0: #{tpu_custom_call.1}
  #allocation0 [shape = 'u32[]', space=smem, size = 0x4, offset = 0x4, fixed_abs, tag = 'smem constant byte address 0x4 - core index']
  #allocation1 [shape = 'u32[72,128]{1,0:T(1,128)}', space=vmem, size = 0x9000, scoped, tag = 'internal scratch']
  %s0 = inlined_call_operand.hbm [shape: f32[8,1024], index: 0, kind: input, shape index: {}]
  %s1 = inlined_call_operand.hbm [shape: bf16[1024,128], index: 1, kind: input, shape index: {}]
  %s2 = inlined_call_operand.vmem [shape: f32[1,128], index: 2, kind: input, shape index: {}]
  %s3 = inlined_call_operand.hbm [shape: bf16[128,128], index: 3, kind: input, shape index: {}]
  %s4 = inlined_call_operand.vmem [shape: f32[1,128], index: 4, kind: input, shape index: {}]
  %s5 = inlined_call_operand.hbm [shape: bf16[128,128], index: 5, kind: input, shape index: {}]
  %s6 = inlined_call_operand.vmem [shape: f32[1,128], index: 6, kind: input, shape index: {}]
  %s7 = inlined_call_operand.hbm [shape: bf16[128,128], index: 7, kind: input, shape index: {}]
  %s8 = inlined_call_operand.vmem [shape: f32[1,128], index: 8, kind: input, shape index: {}]
  %s9 = inlined_call_operand.hbm [shape: bf16[128,128], index: 9, kind: input, shape index: {}]
  %s10 = inlined_call_operand.vmem [shape: f32[1,128], index: 10, kind: input, shape index: {}]
  %s11 = inlined_call_operand.hbm [shape: f32[8,128], index: 11, kind: output, shape index: {}]
  %s12 = sld [smem:[#allocation0]]
  $region78: #{tpu_custom_call.1} parent=0
    _
  %s14 = ssub.s32 1, %s12
  %s15 = scalar_select 0, %s14, %s12
  $region1: #{tpu_custom_call.1} parent=0
    #allocation2 [shape = 'u8[32768]{0}', space=vmem, size = 0x8000, scoped, tag = 'input window, operand 0, single buffered']
    #allocation3 [shape = 's32[1]{0}', space=sflag, size = 0x4, scoped, tag = 'scoped memory for tpu_custom_call.1']
    #allocation4 [shape = 's32[1]{0}', space=sflag, size = 0x4, scoped, tag = 'scoped memory for tpu_custom_call.1']
    #allocation5 [shape = 'u8[262144]{0}', space=vmem, size = 0x40000, scoped, tag = 'input window, operand 1, single buffered']
    #allocation6 [shape = 's32[1]{0}', space=sflag, size = 0x4, scoped, tag = 'scoped memory for tpu_custom_call.1']
    #allocation7 [shape = 'u8[32768]{0}', space=vmem, size = 0x8000, scoped, tag = 'input window, operand 3, single buffered']
    #allocation8 [shape = 'u8[32768]{0}', space=vmem, size = 0x8000, scoped, tag = 'input window, operand 5, single buffered']
    #allocation9 [shape = 's32[1]{0}', space=sflag, size = 0x4, scoped, tag = 'scoped memory for tpu_custom_call.1']
    #allocation10 [shape = 'u8[32768]{0}', space=vmem, size = 0x8000, scoped, tag = 'input window, operand 7, single buffered']
    #allocation11 [shape = 'u8[32768]{0}', space=vmem, size = 0x8000, scoped, tag = 'input window, operand 9, single buffered']
    #allocation12 [shape = 's32[1]{0}', space=sflag, size = 0x4, scoped, tag = 'scoped memory for tpu_custom_call.1']
    #allocation13 [shape = 'u8[4096]{0}', space=vmem, size = 0x1000, scoped, tag = 'output window, operand 0, single buffered']
    %16 = vsyncpa [#allocation3], 0
    %17 = vsyncpa [#allocation6], 0
    %18 = vsyncpa [#allocation9], 0
    %19 = vsyncpa [#allocation12], 0
    %20 = vsyncpa [#allocation4], 0
    // Predicated region
    $region2: #{tpu_custom_call.1} parent=1 // pred_check
      _
    $region3: #{tpu_custom_call.1} parent=1 // pred_check_branch
      %22 = sbr.rel (0) target = $region5
    $region4: #{tpu_custom_call.1} parent=1 // pred_region
      %24 = vsyncadd [#allocation3], 0
      %s26 = sshll.u32 %s0, 4
      %s27 = int_to_ptr.hbm [resolvable:$true] %s26
      %s28 = sshll.u32 [#allocation2], 4
      %s29 = int_to_ptr.vmem [resolvable:$true] %s28
      %31 = dma.hbm_to_vmem [thread:$0]  %s27, 1024, %s29, [#allocation3]
    $region5: #{tpu_custom_call.1} parent=1 // pred_fallthru
      _
    // Predicated region
    $region6: #{tpu_custom_call.1} parent=1 // pred_check
      _
    $region7: #{tpu_custom_call.1} parent=1 // pred_check_branch
      %33 = sbr.rel (0) target = $region9
    $region8: #{tpu_custom_call.1} parent=1 // pred_region
      %35 = vsyncadd [#allocation6], 0
      %s36 = sshll.u32 %s1, 4
      %s37 = int_to_ptr.hbm [resolvable:$true] %s36
      %s38 = sshll.u32 [#allocation5], 4
      %s39 = int_to_ptr.vmem [resolvable:$true] %s38
      %44 = dma.hbm_to_vmem [thread:$0]  %s37, 8192, %s39, [#allocation6], 64, 64, 4
    $region9: #{tpu_custom_call.1} parent=1 // pred_fallthru
      _
    // Predicated region
    $region10: #{tpu_custom_call.1} parent=1 // pred_check
      _
    $region11: #{tpu_custom_call.1} parent=1 // pred_check_branch
      %46 = sbr.rel (0) target = $region13
    $region12: #{tpu_custom_call.1} parent=1 // pred_region
      _
    $region13: #{tpu_custom_call.1} parent=1 // pred_fallthru
      _
    // Predicated region
    $region14: #{tpu_custom_call.1} parent=1 // pred_check
      _
    $region15: #{tpu_custom_call.1} parent=1 // pred_check_branch
      %48 = sbr.rel (0) target = $region17
    $region16: #{tpu_custom_call.1} parent=1 // pred_region
      %50 = vsyncadd [#allocation6], 0
      %s51 = sshll.u32 %s3, 4
      %s52 = int_to_ptr.hbm [resolvable:$true] %s51
      %s53 = sshll.u32 [#allocation7], 4
      %s54 = int_to_ptr.vmem [resolvable:$true] %s53
      %59 = dma.hbm_to_vmem [thread:$0]  %s52, 1024, %s54, [#allocation6], 64, 64, 4
    $region17: #{tpu_custom_call.1} parent=1 // pred_fallthru
      _
    // Predicated region
    $region18: #{tpu_custom_call.1} parent=1 // pred_check
      _
    $region19: #{tpu_custom_call.1} parent=1 // pred_check_branch
      %61 = sbr.rel (0) target = $region21
    $region20: #{tpu_custom_call.1} parent=1 // pred_region
      _
    $region21: #{tpu_custom_call.1} parent=1 // pred_fallthru
      _
    // Predicated region
    $region22: #{tpu_custom_call.1} parent=1 // pred_check
      _
    $region23: #{tpu_custom_call.1} parent=1 // pred_check_branch
      %63 = sbr.rel (0) target = $region25
    $region24: #{tpu_custom_call.1} parent=1 // pred_region
      %65 = vsyncadd [#allocation9], 0
      %s66 = sshll.u32 %s5, 4
      %s67 = int_to_ptr.hbm [resolvable:$true] %s66
      %s68 = sshll.u32 [#allocation8], 4
      %s69 = int_to_ptr.vmem [resolvable:$true] %s68
      %74 = dma.hbm_to_vmem [thread:$0]  %s67, 1024, %s69, [#allocation9], 64, 64, 4
    $region25: #{tpu_custom_call.1} parent=1 // pred_fallthru
      _
    // Predicated region
    $region26: #{tpu_custom_call.1} parent=1 // pred_check
      _
    $region27: #{tpu_custom_call.1} parent=1 // pred_check_branch
      %76 = sbr.rel (0) target = $region29
    $region28: #{tpu_custom_call.1} parent=1 // pred_region
      _
    $region29: #{tpu_custom_call.1} parent=1 // pred_fallthru
      _
    // Predicated region
    $region30: #{tpu_custom_call.1} parent=1 // pred_check
      _
    $region31: #{tpu_custom_call.1} parent=1 // pred_check_branch
      %78 = sbr.rel (0) target = $region33
    $region32: #{tpu_custom_call.1} parent=1 // pred_region
      %80 = vsyncadd [#allocation9], 0
      %s81 = sshll.u32 %s7, 4
      %s82 = int_to_ptr.hbm [resolvable:$true] %s81
      %s83 = sshll.u32 [#allocation10], 4
      %s84 = int_to_ptr.vmem [resolvable:$true] %s83
      %89 = dma.hbm_to_vmem [thread:$0]  %s82, 1024, %s84, [#allocation9], 64, 64, 4
    $region33: #{tpu_custom_call.1} parent=1 // pred_fallthru
      _
    // Predicated region
    $region34: #{tpu_custom_call.1} parent=1 // pred_check
      _
    $region35: #{tpu_custom_call.1} parent=1 // pred_check_branch
      %91 = sbr.rel (0) target = $region37
    $region36: #{tpu_custom_call.1} parent=1 // pred_region
      _
    $region37: #{tpu_custom_call.1} parent=1 // pred_fallthru
      _
    // Predicated region
    $region38: #{tpu_custom_call.1} parent=1 // pred_check
      _
    $region39: #{tpu_custom_call.1} parent=1 // pred_check_branch
      %93 = sbr.rel (0) target = $region41
    $region40: #{tpu_custom_call.1} parent=1 // pred_region
      %95 = vsyncadd [#allocation12], 0
      %s96 = sshll.u32 %s9, 4
      %s97 = int_to_ptr.hbm [resolvable:$true] %s96
      %s98 = sshll.u32 [#allocation11], 4
      %s99 = int_to_ptr.vmem [resolvable:$true] %s98
      %104 = dma.hbm_to_vmem [thread:$0]  %s97, 1024, %s99, [#allocation12], 64, 64, 4
    $region41: #{tpu_custom_call.1} parent=1 // pred_fallthru
      _
    // Predicated region
    $region42: #{tpu_custom_call.1} parent=1 // pred_check
      _
    $region43: #{tpu_custom_call.1} parent=1 // pred_check_branch
      %106 = sbr.rel (0) target = $region45
    $region44: #{tpu_custom_call.1} parent=1 // pred_region
      _
    $region45: #{tpu_custom_call.1} parent=1 // pred_fallthru
      _
    // Predicated region
    $region46: #{tpu_custom_call.1} parent=1 // pred_check
      _
    $region47: #{tpu_custom_call.1} parent=1 // pred_check_branch
      %108 = sbr.rel (0) target = $region49
    $region48: #{tpu_custom_call.1} parent=1 // pred_region
      %110 = dma.done [#allocation3], 1024
    $region49: #{tpu_custom_call.1} parent=1 // pred_fallthru
      _
    // Predicated region
    $region50: #{tpu_custom_call.1} parent=1 // pred_check
      _
    $region51: #{tpu_custom_call.1} parent=1 // pred_check_branch
      %112 = sbr.rel (0) target = $region53
    $region52: #{tpu_custom_call.1} parent=1 // pred_region
      %114 = dma.done [#allocation6], 8192
    $region53: #{tpu_custom_call.1} parent=1 // pred_fallthru
      _
    // Predicated region
    $region54: #{tpu_custom_call.1} parent=1 // pred_check
      _
    $region55: #{tpu_custom_call.1} parent=1 // pred_check_branch
      %116 = sbr.rel (0) target = $region57
    $region56: #{tpu_custom_call.1} parent=1 // pred_region
      %118 = dma.done [#allocation6], 1024
    $region57: #{tpu_custom_call.1} parent=1 // pred_fallthru
      _
    // Predicated region
    $region58: #{tpu_custom_call.1} parent=1 // pred_check
      _
    $region59: #{tpu_custom_call.1} parent=1 // pred_check_branch
      %120 = sbr.rel (0) target = $region61
    $region60: #{tpu_custom_call.1} parent=1 // pred_region
      %122 = dma.done [#allocation9], 1024
    $region61: #{tpu_custom_call.1} parent=1 // pred_fallthru
      _
    // Predicated region
    $region62: #{tpu_custom_call.1} parent=1 // pred_check
      _
    $region63: #{tpu_custom_call.1} parent=1 // pred_check_branch
      %124 = sbr.rel (0) target = $region65
    $region64: #{tpu_custom_call.1} parent=1 // pred_region
      %126 = dma.done [#allocation9], 1024
    $region65: #{tpu_custom_call.1} parent=1 // pred_fallthru
      _
    // Predicated region
    $region66: #{tpu_custom_call.1} parent=1 // pred_check
      _
    $region67: #{tpu_custom_call.1} parent=1 // pred_check_branch
      %128 = sbr.rel (0) target = $region69
    $region68: #{tpu_custom_call.1} parent=1 // pred_region
      %130 = dma.done [#allocation12], 1024
    $region69: #{tpu_custom_call.1} parent=1 // pred_fallthru
      _
    %v131 = vld [vmem:[#allocation2] sm:$0xff]
    %v132 = vld [vmem:[#allocation2 + $0x8] sm:$0xff]
    %v133 = vld [vmem:[#allocation2 + $0x10] sm:$0xff]
    %v134 = vld [vmem:[#allocation2 + $0x18] sm:$0xff]
    %v135 = vld [vmem:[#allocation2 + $0x20] sm:$0xff]
    %v136 = vld [vmem:[#allocation2 + $0x28] sm:$0xff]
    %v137 = vld [vmem:[#allocation2 + $0x30] sm:$0xff]
    %v138 = vld [vmem:[#allocation2 + $0x38] sm:$0xff]
    %v139 = vpack.c.bf16 %v131, %v131
    %v140 = vpack.c.bf16 %v132, %v132
    %v141 = vpack.c.bf16 %v133, %v133
    %v142 = vpack.c.bf16 %v134, %v134
    %v143 = vpack.c.bf16 %v135, %v135
    %v144 = vpack.c.bf16 %v136, %v136
    %v145 = vpack.c.bf16 %v137, %v137
    %v146 = vpack.c.bf16 %v138, %v138
    %v147 = vld [vmem:[#allocation5] sm:$0xf]
    %v148 = vld [vmem:[#allocation5 + $0x4] sm:$0xf]
    %v149 = vld [vmem:[#allocation5 + $0x8] sm:$0xf]
    %v150 = vld [vmem:[#allocation5 + $0xc] sm:$0xf]
    %v151 = vld [vmem:[#allocation5 + $0x10] sm:$0xf]
    %v152 = vld [vmem:[#allocation5 + $0x14] sm:$0xf]
    %v153 = vld [vmem:[#allocation5 + $0x18] sm:$0xf]
    %v154 = vld [vmem:[#allocation5 + $0x1c] sm:$0xf]
    %v155 = vld [vmem:[#allocation5 + $0x20] sm:$0xf]
    %v156 = vld [vmem:[#allocation5 + $0x24] sm:$0xf]
    %v157 = vld [vmem:[#allocation5 + $0x28] sm:$0xf]
    %v158 = vld [vmem:[#allocation5 + $0x2c] sm:$0xf]
    %v159 = vld [vmem:[#allocation5 + $0x30] sm:$0xf]
    %v160 = vld [vmem:[#allocation5 + $0x34] sm:$0xf]
    %v161 = vld [vmem:[#allocation5 + $0x38] sm:$0xf]
    %v162 = vld [vmem:[#allocation5 + $0x3c] sm:$0xf]
    %v163 = vld [vmem:[#allocation5 + $0x40] sm:$0xf]
    %v164 = vld [vmem:[#allocation5 + $0x44] sm:$0xf]
    %v165 = vld [vmem:[#allocation5 + $0x48] sm:$0xf]
    %v166 = vld [vmem:[#allocation5 + $0x4c] sm:$0xf]
    %v167 = vld [vmem:[#allocation5 + $0x50] sm:$0xf]
    %v168 = vld [vmem:[#allocation5 + $0x54] sm:$0xf]
    %v169 = vld [vmem:[#allocation5 + $0x58] sm:$0xf]
    %v170 = vld [vmem:[#allocation5 + $0x5c] sm:$0xf]
    %v171 = vld [vmem:[#allocation5 + $0x60] sm:$0xf]
    %v172 = vld [vmem:[#allocation5 + $0x64] sm:$0xf]
    %v173 = vld [vmem:[#allocation5 + $0x68] sm:$0xf]
    %v174 = vld [vmem:[#allocation5 + $0x6c] sm:$0xf]
    %v175 = vld [vmem:[#allocation5 + $0x70] sm:$0xf]
    %v176 = vld [vmem:[#allocation5 + $0x74] sm:$0xf]
    %v177 = vld [vmem:[#allocation5 + $0x78] sm:$0xf]
    %v178 = vld [vmem:[#allocation5 + $0x7c] sm:$0xf]
    %v179 = vld [vmem:[#allocation5 + $0x80] sm:$0xf]
    %v180 = vld [vmem:[#allocation5 + $0x84] sm:$0xf]
    %v181 = vld [vmem:[#allocation5 + $0x88] sm:$0xf]
    %v182 = vld [vmem:[#allocation5 + $0x8c] sm:$0xf]
    %v183 = vld [vmem:[#allocation5 + $0x90] sm:$0xf]
    %v184 = vld [vmem:[#allocation5 + $0x94] sm:$0xf]
    %v185 = vld [vmem:[#allocation5 + $0x98] sm:$0xf]
    %v186 = vld [vmem:[#allocation5 + $0x9c] sm:$0xf]
    %v187 = vld [vmem:[#allocation5 + $0xa0] sm:$0xf]
    %v188 = vld [vmem:[#allocation5 + $0xa4] sm:$0xf]
    %v189 = vld [vmem:[#allocation5 + $0xa8] sm:$0xf]
    %v190 = vld [vmem:[#allocation5 + $0xac] sm:$0xf]
    %v191 = vld [vmem:[#allocation5 + $0xb0] sm:$0xf]
    %v192 = vld [vmem:[#allocation5 + $0xb4] sm:$0xf]
    %v193 = vld [vmem:[#allocation5 + $0xb8] sm:$0xf]
    %v194 = vld [vmem:[#allocation5 + $0xbc] sm:$0xf]
    %v195 = vld [vmem:[#allocation5 + $0xc0] sm:$0xf]
    %v196 = vld [vmem:[#allocation5 + $0xc4] sm:$0xf]
    %v197 = vld [vmem:[#allocation5 + $0xc8] sm:$0xf]
    %v198 = vld [vmem:[#allocation5 + $0xcc] sm:$0xf]
    %v199 = vld [vmem:[#allocation5 + $0xd0] sm:$0xf]
    %v200 = vld [vmem:[#allocation5 + $0xd4] sm:$0xf]
    %v201 = vld [vmem:[#allocation5 + $0xd8] sm:$0xf]
    %v202 = vld [vmem:[#allocation5 + $0xdc] sm:$0xf]
    %v203 = vld [vmem:[#allocation5 + $0xe0] sm:$0xf]
    %v204 = vld [vmem:[#allocation5 + $0xe4] sm:$0xf]
    %v205 = vld [vmem:[#allocation5 + $0xe8] sm:$0xf]
    %v206 = vld [vmem:[#allocation5 + $0xec] sm:$0xf]
    %v207 = vld [vmem:[#allocation5 + $0xf0] sm:$0xf]
    %v208 = vld [vmem:[#allocation5 + $0xf4] sm:$0xf]
    %v209 = vld [vmem:[#allocation5 + $0xf8] sm:$0xf]
    %v210 = vld [vmem:[#allocation5 + $0xfc] sm:$0xf]
    %v211 = vld [vmem:[#allocation5 + $0x100] sm:$0xf]
    %v212 = vld [vmem:[#allocation5 + $0x104] sm:$0xf]
    %v213 = vld [vmem:[#allocation5 + $0x108] sm:$0xf]
    %v214 = vld [vmem:[#allocation5 + $0x10c] sm:$0xf]
    %v215 = vld [vmem:[#allocation5 + $0x110] sm:$0xf]
    %v216 = vld [vmem:[#allocation5 + $0x114] sm:$0xf]
    %v217 = vld [vmem:[#allocation5 + $0x118] sm:$0xf]
    %v218 = vld [vmem:[#allocation5 + $0x11c] sm:$0xf]
    %v219 = vld [vmem:[#allocation5 + $0x120] sm:$0xf]
    %v220 = vld [vmem:[#allocation5 + $0x124] sm:$0xf]
    %v221 = vld [vmem:[#allocation5 + $0x128] sm:$0xf]
    %v222 = vld [vmem:[#allocation5 + $0x12c] sm:$0xf]
    %v223 = vld [vmem:[#allocation5 + $0x130] sm:$0xf]
    %v224 = vld [vmem:[#allocation5 + $0x134] sm:$0xf]
    %v225 = vld [vmem:[#allocation5 + $0x138] sm:$0xf]
    %v226 = vld [vmem:[#allocation5 + $0x13c] sm:$0xf]
    %v227 = vld [vmem:[#allocation5 + $0x140] sm:$0xf]
    %v228 = vld [vmem:[#allocation5 + $0x144] sm:$0xf]
    %v229 = vld [vmem:[#allocation5 + $0x148] sm:$0xf]
    %v230 = vld [vmem:[#allocation5 + $0x14c] sm:$0xf]
    %v231 = vld [vmem:[#allocation5 + $0x150] sm:$0xf]
    %v232 = vld [vmem:[#allocation5 + $0x154] sm:$0xf]
    %v233 = vld [vmem:[#allocation5 + $0x158] sm:$0xf]
    %v234 = vld [vmem:[#allocation5 + $0x15c] sm:$0xf]
    %v235 = vld [vmem:[#allocation5 + $0x160] sm:$0xf]
    %v236 = vld [vmem:[#allocation5 + $0x164] sm:$0xf]
    %v237 = vld [vmem:[#allocation5 + $0x168] sm:$0xf]
    %v238 = vld [vmem:[#allocation5 + $0x16c] sm:$0xf]
    %v239 = vld [vmem:[#allocation5 + $0x170] sm:$0xf]
    %v240 = vld [vmem:[#allocation5 + $0x174] sm:$0xf]
    %v241 = vld [vmem:[#allocation5 + $0x178] sm:$0xf]
    %v242 = vld [vmem:[#allocation5 + $0x17c] sm:$0xf]
    %v243 = vld [vmem:[#allocation5 + $0x180] sm:$0xf]
    %v244 = vld [vmem:[#allocation5 + $0x184] sm:$0xf]
    %v245 = vld [vmem:[#allocation5 + $0x188] sm:$0xf]
    %v246 = vld [vmem:[#allocation5 + $0x18c] sm:$0xf]
    %v247 = vld [vmem:[#allocation5 + $0x190] sm:$0xf]
    %v248 = vld [vmem:[#allocation5 + $0x194] sm:$0xf]
    %v249 = vld [vmem:[#allocation5 + $0x198] sm:$0xf]
    %v250 = vld [vmem:[#allocation5 + $0x19c] sm:$0xf]
    %v251 = vld [vmem:[#allocation5 + $0x1a0] sm:$0xf]
    %v252 = vld [vmem:[#allocation5 + $0x1a4] sm:$0xf]
    %v253 = vld [vmem:[#allocation5 + $0x1a8] sm:$0xf]
    %v254 = vld [vmem:[#allocation5 + $0x1ac] sm:$0xf]
    %v255 = vld [vmem:[#allocation5 + $0x1b0] sm:$0xf]
    %v256 = vld [vmem:[#allocation5 + $0x1b4] sm:$0xf]
    %v257 = vld [vmem:[#allocation5 + $0x1b8] sm:$0xf]
    %v258 = vld [vmem:[#allocation5 + $0x1bc] sm:$0xf]
    %v259 = vld [vmem:[#allocation5 + $0x1c0] sm:$0xf]
    %v260 = vld [vmem:[#allocation5 + $0x1c4] sm:$0xf]
    %v261 = vld [vmem:[#allocation5 + $0x1c8] sm:$0xf]
    %v262 = vld [vmem:[#allocation5 + $0x1cc] sm:$0xf]
    %v263 = vld [vmem:[#allocation5 + $0x1d0] sm:$0xf]
    %v264 = vld [vmem:[#allocation5 + $0x1d4] sm:$0xf]
    %v265 = vld [vmem:[#allocation5 + $0x1d8] sm:$0xf]
    %v266 = vld [vmem:[#allocation5 + $0x1dc] sm:$0xf]
    %v267 = vld [vmem:[#allocation5 + $0x1e0] sm:$0xf]
    %v268 = vld [vmem:[#allocation5 + $0x1e4] sm:$0xf]
    %v269 = vld [vmem:[#allocation5 + $0x1e8] sm:$0xf]
    %v270 = vld [vmem:[#allocation5 + $0x1ec] sm:$0xf]
    %v271 = vld [vmem:[#allocation5 + $0x1f0] sm:$0xf]
    %v272 = vld [vmem:[#allocation5 + $0x1f4] sm:$0xf]
    %v273 = vld [vmem:[#allocation5 + $0x1f8] sm:$0xf]
    %v274 = vld [vmem:[#allocation5 + $0x1fc] sm:$0xf]
    %v275 = vld [vmem:[%s2] sm:$0x1]
    %v277 = vperm.slane %v275, 0
    %v407 = vunpack.c.l.b16 %v147
    %v408 = vunpack.c.l.b16 %v148
    %v409 = vunpack.c.l.b16 %v149
    %v410 = vunpack.c.l.b16 %v150
    %v411 = vunpack.c.l.b16 %v151
    %v412 = vunpack.c.l.b16 %v152
    %v413 = vunpack.c.l.b16 %v153
    %v414 = vunpack.c.l.b16 %v154
    %v415 = vunpack.c.l.b16 %v155
    %v416 = vunpack.c.l.b16 %v156
    %v417 = vunpack.c.l.b16 %v157
    %v418 = vunpack.c.l.b16 %v158
    %v419 = vunpack.c.l.b16 %v159
    %v420 = vunpack.c.l.b16 %v160
    %v421 = vunpack.c.l.b16 %v161
    %v422 = vunpack.c.l.b16 %v162
    %v423 = vunpack.c.l.b16 %v163
    %v424 = vunpack.c.l.b16 %v164
    %v425 = vunpack.c.l.b16 %v165
    %v426 = vunpack.c.l.b16 %v166
    %v427 = vunpack.c.l.b16 %v167
    %v428 = vunpack.c.l.b16 %v168
    %v429 = vunpack.c.l.b16 %v169
    %v430 = vunpack.c.l.b16 %v170
    %v431 = vunpack.c.l.b16 %v171
    %v432 = vunpack.c.l.b16 %v172
    %v433 = vunpack.c.l.b16 %v173
    %v434 = vunpack.c.l.b16 %v174
    %v435 = vunpack.c.l.b16 %v175
    %v436 = vunpack.c.l.b16 %v176
    %v437 = vunpack.c.l.b16 %v177
    %v438 = vunpack.c.l.b16 %v178
    %v439 = vunpack.c.l.b16 %v179
    %v440 = vunpack.c.l.b16 %v180
    %v441 = vunpack.c.l.b16 %v181
    %v442 = vunpack.c.l.b16 %v182
    %v443 = vunpack.c.l.b16 %v183
    %v444 = vunpack.c.l.b16 %v184
    %v445 = vunpack.c.l.b16 %v185
    %v446 = vunpack.c.l.b16 %v186
    %v447 = vunpack.c.l.b16 %v187
    %v448 = vunpack.c.l.b16 %v188
    %v449 = vunpack.c.l.b16 %v189
    %v450 = vunpack.c.l.b16 %v190
    %v451 = vunpack.c.l.b16 %v191
    %v452 = vunpack.c.l.b16 %v192
    %v453 = vunpack.c.l.b16 %v193
    %v454 = vunpack.c.l.b16 %v194
    %v455 = vunpack.c.l.b16 %v195
    %v456 = vunpack.c.l.b16 %v196
    %v457 = vunpack.c.l.b16 %v197
    %v458 = vunpack.c.l.b16 %v198
    %v459 = vunpack.c.l.b16 %v199
    %v460 = vunpack.c.l.b16 %v200
    %v461 = vunpack.c.l.b16 %v201
    %v462 = vunpack.c.l.b16 %v202
    %v463 = vunpack.c.l.b16 %v203
    %v464 = vunpack.c.l.b16 %v204
    %v465 = vunpack.c.l.b16 %v205
    %v466 = vunpack.c.l.b16 %v206
    %v467 = vunpack.c.l.b16 %v207
    %v468 = vunpack.c.l.b16 %v208
    %v469 = vunpack.c.l.b16 %v209
    %v470 = vunpack.c.l.b16 %v210
    %v471 = vunpack.c.l.b16 %v211
    %v472 = vunpack.c.l.b16 %v212
    %v473 = vunpack.c.l.b16 %v213
    %v474 = vunpack.c.l.b16 %v214
    %v475 = vunpack.c.l.b16 %v215
    %v476 = vunpack.c.l.b16 %v216
    %v477 = vunpack.c.l.b16 %v217
    %v478 = vunpack.c.l.b16 %v218
    %v479 = vunpack.c.l.b16 %v219
    %v480 = vunpack.c.l.b16 %v220
    %v481 = vunpack.c.l.b16 %v221
    %v482 = vunpack.c.l.b16 %v222
    %v483 = vunpack.c.l.b16 %v223
    %v484 = vunpack.c.l.b16 %v224
    %v485 = vunpack.c.l.b16 %v225
    %v486 = vunpack.c.l.b16 %v226
    %v487 = vunpack.c.l.b16 %v227
    %v488 = vunpack.c.l.b16 %v228
    %v489 = vunpack.c.l.b16 %v229
    %v490 = vunpack.c.l.b16 %v230
    %v491 = vunpack.c.l.b16 %v231
    %v492 = vunpack.c.l.b16 %v232
    %v493 = vunpack.c.l.b16 %v233
    %v494 = vunpack.c.l.b16 %v234
    %v495 = vunpack.c.l.b16 %v235
    %v496 = vunpack.c.l.b16 %v236
    %v497 = vunpack.c.l.b16 %v237
    %v498 = vunpack.c.l.b16 %v238
    %v499 = vunpack.c.l.b16 %v239
    %v500 = vunpack.c.l.b16 %v240
    %v501 = vunpack.c.l.b16 %v241
    %v502 = vunpack.c.l.b16 %v242
    %v503 = vunpack.c.l.b16 %v243
    %v504 = vunpack.c.l.b16 %v244
    %v505 = vunpack.c.l.b16 %v245
    %v506 = vunpack.c.l.b16 %v246
    %v507 = vunpack.c.l.b16 %v247
    %v508 = vunpack.c.l.b16 %v248
    %v509 = vunpack.c.l.b16 %v249
    %v510 = vunpack.c.l.b16 %v250
    %v511 = vunpack.c.l.b16 %v251
    %v512 = vunpack.c.l.b16 %v252
    %v513 = vunpack.c.l.b16 %v253
    %v514 = vunpack.c.l.b16 %v254
    %v515 = vunpack.c.l.b16 %v255
    %v516 = vunpack.c.l.b16 %v256
    %v517 = vunpack.c.l.b16 %v257
    %v518 = vunpack.c.l.b16 %v258
    %v519 = vunpack.c.l.b16 %v259
    %v520 = vunpack.c.l.b16 %v260
    %v521 = vunpack.c.l.b16 %v261
    %v522 = vunpack.c.l.b16 %v262
    %v523 = vunpack.c.l.b16 %v263
    %v524 = vunpack.c.l.b16 %v264
    %v525 = vunpack.c.l.b16 %v265
    %v526 = vunpack.c.l.b16 %v266
    %v527 = vunpack.c.l.b16 %v267
    %v528 = vunpack.c.l.b16 %v268
    %v529 = vunpack.c.l.b16 %v269
    %v530 = vunpack.c.l.b16 %v270
    %v531 = vunpack.c.l.b16 %v271
    %v532 = vunpack.c.l.b16 %v272
    %v533 = vunpack.c.l.b16 %v273
    %v534 = vunpack.c.l.b16 %v274
    %v535 = vpack.c.b16 %v408, %v407
    %v536 = vpack.c.b16 %v410, %v409
    %v537 = vpack.c.b16 %v412, %v411
    %v538 = vpack.c.b16 %v414, %v413
    %v539 = vpack.c.b16 %v416, %v415
    %v540 = vpack.c.b16 %v418, %v417
    %v541 = vpack.c.b16 %v420, %v419
    %v542 = vpack.c.b16 %v422, %v421
    %v543 = vpack.c.b16 %v424, %v423
    %v544 = vpack.c.b16 %v426, %v425
    %v545 = vpack.c.b16 %v428, %v427
    %v546 = vpack.c.b16 %v430, %v429
    %v547 = vpack.c.b16 %v432, %v431
    %v548 = vpack.c.b16 %v434, %v433
    %v549 = vpack.c.b16 %v436, %v435
    %v550 = vpack.c.b16 %v438, %v437
    %v551 = vpack.c.b16 %v440, %v439
    %v552 = vpack.c.b16 %v442, %v441
    %v553 = vpack.c.b16 %v444, %v443
    %v554 = vpack.c.b16 %v446, %v445
    %v555 = vpack.c.b16 %v448, %v447
    %v556 = vpack.c.b16 %v450, %v449
    %v557 = vpack.c.b16 %v452, %v451
    %v558 = vpack.c.b16 %v454, %v453
    %v559 = vpack.c.b16 %v456, %v455
    %v560 = vpack.c.b16 %v458, %v457
    %v561 = vpack.c.b16 %v460, %v459
    %v562 = vpack.c.b16 %v462, %v461
    %v563 = vpack.c.b16 %v464, %v463
    %v564 = vpack.c.b16 %v466, %v465
    %v565 = vpack.c.b16 %v468, %v467
    %v566 = vpack.c.b16 %v470, %v469
    %v567 = vpack.c.b16 %v472, %v471
    %v568 = vpack.c.b16 %v474, %v473
    %v569 = vpack.c.b16 %v476, %v475
    %v570 = vpack.c.b16 %v478, %v477
    %v571 = vpack.c.b16 %v480, %v479
    %v572 = vpack.c.b16 %v482, %v481
    %v573 = vpack.c.b16 %v484, %v483
    %v574 = vpack.c.b16 %v486, %v485
    %v575 = vpack.c.b16 %v488, %v487
    %v576 = vpack.c.b16 %v490, %v489
    %v577 = vpack.c.b16 %v492, %v491
    %v578 = vpack.c.b16 %v494, %v493
    %v579 = vpack.c.b16 %v496, %v495
    %v580 = vpack.c.b16 %v498, %v497
    %v581 = vpack.c.b16 %v500, %v499
    %v582 = vpack.c.b16 %v502, %v501
    %v583 = vpack.c.b16 %v504, %v503
    %v584 = vpack.c.b16 %v506, %v505
    %v585 = vpack.c.b16 %v508, %v507
    %v586 = vpack.c.b16 %v510, %v509
    %v587 = vpack.c.b16 %v512, %v511
    %v588 = vpack.c.b16 %v514, %v513
    %v589 = vpack.c.b16 %v516, %v515
    %v590 = vpack.c.b16 %v518, %v517
    %v591 = vpack.c.b16 %v520, %v519
    %v592 = vpack.c.b16 %v522, %v521
    %v593 = vpack.c.b16 %v524, %v523
    %v594 = vpack.c.b16 %v526, %v525
    %v595 = vpack.c.b16 %v528, %v527
    %v596 = vpack.c.b16 %v530, %v529
    %v597 = vpack.c.b16 %v532, %v531
    %v598 = vpack.c.b16 %v534, %v533
    %663 = vmatpush.bf16.msra.mxu0 %v542
    %664 = vmatpush.bf16.msra.mxu0 %v541
    %665 = vmatpush.bf16.msra.mxu0 %v540
    %666 = vmatpush.bf16.msra.mxu0 %v539
    %667 = vmatpush.bf16.msra.mxu0 %v538
    %668 = vmatpush.bf16.msra.mxu0 %v537
    %669 = vmatpush.bf16.msra.mxu0 %v536
    %670 = vmatpush.bf16.msra.mxu0 %v535
    %671 = vmatmul.bf16.gmra.mxu0 %v139
    %v672 = vpop.f32.mrf.mxu0
    %v673 = vadd.f32 %v277, %v672
    %v674 = vpop.f32.mrf.mxu0
    %675 = vdwg.mxu0
    %676 = vmatpush.bf16.msra.mxu0 %v550
    %677 = vmatpush.bf16.msra.mxu0 %v549
    %678 = vmatpush.bf16.msra.mxu0 %v548
    %679 = vmatpush.bf16.msra.mxu0 %v547
    %680 = vmatpush.bf16.msra.mxu0 %v546
    %681 = vmatpush.bf16.msra.mxu0 %v545
    %682 = vmatpush.bf16.msra.mxu0 %v544
    %683 = vmatpush.bf16.msra.mxu0 %v543
    %684 = vmatmul.bf16.gmra.mxu0 %v140
    %v685 = vpop.f32.mrf.mxu0
    %v686 = vadd.f32 %v673, %v685
    %v687 = vpop.f32.mrf.mxu0
    %688 = vdwg.mxu0
    %689 = vmatpush.bf16.msra.mxu0 %v558
    %690 = vmatpush.bf16.msra.mxu0 %v557
    %691 = vmatpush.bf16.msra.mxu0 %v556
    %692 = vmatpush.bf16.msra.mxu0 %v555
    %693 = vmatpush.bf16.msra.mxu0 %v554
    %694 = vmatpush.bf16.msra.mxu0 %v553
    %695 = vmatpush.bf16.msra.mxu0 %v552
    %696 = vmatpush.bf16.msra.mxu0 %v551
    %697 = vmatmul.bf16.gmra.mxu0 %v141
    %v698 = vpop.f32.mrf.mxu0
    %v699 = vadd.f32 %v686, %v698
    %v700 = vpop.f32.mrf.mxu0
    %701 = vdwg.mxu0
    %702 = vmatpush.bf16.msra.mxu0 %v566
    %703 = vmatpush.bf16.msra.mxu0 %v565
    %704 = vmatpush.bf16.msra.mxu0 %v564
    %705 = vmatpush.bf16.msra.mxu0 %v563
    %706 = vmatpush.bf16.msra.mxu0 %v562
    %707 = vmatpush.bf16.msra.mxu0 %v561
    %708 = vmatpush.bf16.msra.mxu0 %v560
    %709 = vmatpush.bf16.msra.mxu0 %v559
    %710 = vmatmul.bf16.gmra.mxu0 %v142
    %v711 = vpop.f32.mrf.mxu0
    %v712 = vadd.f32 %v699, %v711
    %v713 = vpop.f32.mrf.mxu0
    %714 = vdwg.mxu0
    %715 = vmatpush.bf16.msra.mxu0 %v574
    %716 = vmatpush.bf16.msra.mxu0 %v573
    %717 = vmatpush.bf16.msra.mxu0 %v572
    %718 = vmatpush.bf16.msra.mxu0 %v571
    %719 = vmatpush.bf16.msra.mxu0 %v570
    %720 = vmatpush.bf16.msra.mxu0 %v569
    %721 = vmatpush.bf16.msra.mxu0 %v568
    %722 = vmatpush.bf16.msra.mxu0 %v567
    %723 = vmatmul.bf16.gmra.mxu0 %v143
    %v724 = vpop.f32.mrf.mxu0
    %v725 = vadd.f32 %v712, %v724
    %v726 = vpop.f32.mrf.mxu0
    %727 = vdwg.mxu0
    %728 = vmatpush.bf16.msra.mxu0 %v582
    %729 = vmatpush.bf16.msra.mxu0 %v581
    %730 = vmatpush.bf16.msra.mxu0 %v580
    %731 = vmatpush.bf16.msra.mxu0 %v579
    %732 = vmatpush.bf16.msra.mxu0 %v578
    %733 = vmatpush.bf16.msra.mxu0 %v577
    %734 = vmatpush.bf16.msra.mxu0 %v576
    %735 = vmatpush.bf16.msra.mxu0 %v575
    %736 = vmatmul.bf16.gmra.mxu0 %v144
    %v737 = vpop.f32.mrf.mxu0
    %v738 = vadd.f32 %v725, %v737
    %v739 = vpop.f32.mrf.mxu0
    %740 = vdwg.mxu0
    %741 = vmatpush.bf16.msra.mxu0 %v590
    %742 = vmatpush.bf16.msra.mxu0 %v589
    %743 = vmatpush.bf16.msra.mxu0 %v588
    %744 = vmatpush.bf16.msra.mxu0 %v587
    %745 = vmatpush.bf16.msra.mxu0 %v586
    %746 = vmatpush.bf16.msra.mxu0 %v585
    %747 = vmatpush.bf16.msra.mxu0 %v584
    %748 = vmatpush.bf16.msra.mxu0 %v583
    %749 = vmatmul.bf16.gmra.mxu0 %v145
    %v750 = vpop.f32.mrf.mxu0
    %v751 = vadd.f32 %v738, %v750
    %v752 = vpop.f32.mrf.mxu0
    %753 = vdwg.mxu0
    %754 = vmatpush.bf16.msra.mxu0 %v598
    %755 = vmatpush.bf16.msra.mxu0 %v597
    %756 = vmatpush.bf16.msra.mxu0 %v596
    %757 = vmatpush.bf16.msra.mxu0 %v595
    %758 = vmatpush.bf16.msra.mxu0 %v594
    %759 = vmatpush.bf16.msra.mxu0 %v593
    %760 = vmatpush.bf16.msra.mxu0 %v592
    %761 = vmatpush.bf16.msra.mxu0 %v591
    %762 = vmatmul.bf16.gmra.mxu0 %v146
    %v763 = vpop.f32.mrf.mxu0
    %v764 = vadd.f32 %v751, %v763
    %v765 = vpop.f32.mrf.mxu0
    %766 = vdwg.mxu0
    %v767 = vmax.f32 %v764, 0.0
    %v768 = vpack.c.bf16 %v767, %v767
    %v769 = vld [vmem:[#allocation7] sm:$0xf]
    %v770 = vld [vmem:[#allocation7 + $0x4] sm:$0xf]
    %v771 = vld [vmem:[#allocation7 + $0x8] sm:$0xf]
    %v772 = vld [vmem:[#allocation7 + $0xc] sm:$0xf]
    %v773 = vld [vmem:[#allocation7 + $0x10] sm:$0xf]
    %v774 = vld [vmem:[#allocation7 + $0x14] sm:$0xf]
    %v775 = vld [vmem:[#allocation7 + $0x18] sm:$0xf]
    %v776 = vld [vmem:[#allocation7 + $0x1c] sm:$0xf]
    %v777 = vld [vmem:[#allocation7 + $0x20] sm:$0xf]
    %v778 = vld [vmem:[#allocation7 + $0x24] sm:$0xf]
    %v779 = vld [vmem:[#allocation7 + $0x28] sm:$0xf]
    %v780 = vld [vmem:[#allocation7 + $0x2c] sm:$0xf]
    %v781 = vld [vmem:[#allocation7 + $0x30] sm:$0xf]
    %v782 = vld [vmem:[#allocation7 + $0x34] sm:$0xf]
    %v783 = vld [vmem:[#allocation7 + $0x38] sm:$0xf]
    %v784 = vld [vmem:[#allocation7 + $0x3c] sm:$0xf]
    %v785 = vld [vmem:[%s4] sm:$0x1]
    %v787 = vperm.slane %v785, 0
    %v805 = vunpack.c.l.b16 %v769
    %v806 = vunpack.c.l.b16 %v770
    %v807 = vunpack.c.l.b16 %v771
    %v808 = vunpack.c.l.b16 %v772
    %v809 = vunpack.c.l.b16 %v773
    %v810 = vunpack.c.l.b16 %v774
    %v811 = vunpack.c.l.b16 %v775
    %v812 = vunpack.c.l.b16 %v776
    %v813 = vunpack.c.l.b16 %v777
    %v814 = vunpack.c.l.b16 %v778
    %v815 = vunpack.c.l.b16 %v779
    %v816 = vunpack.c.l.b16 %v780
    %v817 = vunpack.c.l.b16 %v781
    %v818 = vunpack.c.l.b16 %v782
    %v819 = vunpack.c.l.b16 %v783
    %v820 = vunpack.c.l.b16 %v784
    %v821 = vpack.c.b16 %v806, %v805
    %v822 = vpack.c.b16 %v808, %v807
    %v823 = vpack.c.b16 %v810, %v809
    %v824 = vpack.c.b16 %v812, %v811
    %v825 = vpack.c.b16 %v814, %v813
    %v826 = vpack.c.b16 %v816, %v815
    %v827 = vpack.c.b16 %v818, %v817
    %v828 = vpack.c.b16 %v820, %v819
    %837 = vmatpush.bf16.msra.mxu0 %v828
    %838 = vmatpush.bf16.msra.mxu0 %v827
    %839 = vmatpush.bf16.msra.mxu0 %v826
    %840 = vmatpush.bf16.msra.mxu0 %v825
    %841 = vmatpush.bf16.msra.mxu0 %v824
    %842 = vmatpush.bf16.msra.mxu0 %v823
    %843 = vmatpush.bf16.msra.mxu0 %v822
    %844 = vmatpush.bf16.msra.mxu0 %v821
    %845 = vmatmul.bf16.gmra.mxu0 %v768
    %v846 = vpop.f32.mrf.mxu0
    %v847 = vadd.f32 %v787, %v846
    %v848 = vpop.f32.mrf.mxu0
    %849 = vdwg.mxu0
    %v850 = vmax.f32 %v847, 0.0
    %v851 = vpack.c.bf16 %v850, %v850
    %v852 = vld [vmem:[#allocation8] sm:$0xf]
    %v853 = vld [vmem:[#allocation8 + $0x4] sm:$0xf]
    %v854 = vld [vmem:[#allocation8 + $0x8] sm:$0xf]
    %v855 = vld [vmem:[#allocation8 + $0xc] sm:$0xf]
    %v856 = vld [vmem:[#allocation8 + $0x10] sm:$0xf]
    %v857 = vld [vmem:[#allocation8 + $0x14] sm:$0xf]
    %v858 = vld [vmem:[#allocation8 + $0x18] sm:$0xf]
    %v859 = vld [vmem:[#allocation8 + $0x1c] sm:$0xf]
    %v860 = vld [vmem:[#allocation8 + $0x20] sm:$0xf]
    %v861 = vld [vmem:[#allocation8 + $0x24] sm:$0xf]
    %v862 = vld [vmem:[#allocation8 + $0x28] sm:$0xf]
    %v863 = vld [vmem:[#allocation8 + $0x2c] sm:$0xf]
    %v864 = vld [vmem:[#allocation8 + $0x30] sm:$0xf]
    %v865 = vld [vmem:[#allocation8 + $0x34] sm:$0xf]
    %v866 = vld [vmem:[#allocation8 + $0x38] sm:$0xf]
    %v867 = vld [vmem:[#allocation8 + $0x3c] sm:$0xf]
    %v868 = vld [vmem:[%s6] sm:$0x1]
    %v870 = vperm.slane %v868, 0
    %v888 = vunpack.c.l.b16 %v852
    %v889 = vunpack.c.l.b16 %v853
    %v890 = vunpack.c.l.b16 %v854
    %v891 = vunpack.c.l.b16 %v855
    %v892 = vunpack.c.l.b16 %v856
    %v893 = vunpack.c.l.b16 %v857
    %v894 = vunpack.c.l.b16 %v858
    %v895 = vunpack.c.l.b16 %v859
    %v896 = vunpack.c.l.b16 %v860
    %v897 = vunpack.c.l.b16 %v861
    %v898 = vunpack.c.l.b16 %v862
    %v899 = vunpack.c.l.b16 %v863
    %v900 = vunpack.c.l.b16 %v864
    %v901 = vunpack.c.l.b16 %v865
    %v902 = vunpack.c.l.b16 %v866
    %v903 = vunpack.c.l.b16 %v867
    %v904 = vpack.c.b16 %v889, %v888
    %v905 = vpack.c.b16 %v891, %v890
    %v906 = vpack.c.b16 %v893, %v892
    %v907 = vpack.c.b16 %v895, %v894
    %v908 = vpack.c.b16 %v897, %v896
    %v909 = vpack.c.b16 %v899, %v898
    %v910 = vpack.c.b16 %v901, %v900
    %v911 = vpack.c.b16 %v903, %v902
    %920 = vmatpush.bf16.msra.mxu0 %v911
    %921 = vmatpush.bf16.msra.mxu0 %v910
    %922 = vmatpush.bf16.msra.mxu0 %v909
    %923 = vmatpush.bf16.msra.mxu0 %v908
    %924 = vmatpush.bf16.msra.mxu0 %v907
    %925 = vmatpush.bf16.msra.mxu0 %v906
    %926 = vmatpush.bf16.msra.mxu0 %v905
    %927 = vmatpush.bf16.msra.mxu0 %v904
    %928 = vmatmul.bf16.gmra.mxu0 %v851
    %v929 = vpop.f32.mrf.mxu0
    %v930 = vadd.f32 %v870, %v929
    %v931 = vpop.f32.mrf.mxu0
    %932 = vdwg.mxu0
    %v933 = vmax.f32 %v930, 0.0
    %v934 = vpack.c.bf16 %v933, %v933
    %v935 = vld [vmem:[#allocation10] sm:$0xf]
    %v936 = vld [vmem:[#allocation10 + $0x4] sm:$0xf]
    %v937 = vld [vmem:[#allocation10 + $0x8] sm:$0xf]
    %v938 = vld [vmem:[#allocation10 + $0xc] sm:$0xf]
    %v939 = vld [vmem:[#allocation10 + $0x10] sm:$0xf]
    %v940 = vld [vmem:[#allocation10 + $0x14] sm:$0xf]
    %v941 = vld [vmem:[#allocation10 + $0x18] sm:$0xf]
    %v942 = vld [vmem:[#allocation10 + $0x1c] sm:$0xf]
    %v943 = vld [vmem:[#allocation10 + $0x20] sm:$0xf]
    %v944 = vld [vmem:[#allocation10 + $0x24] sm:$0xf]
    %v945 = vld [vmem:[#allocation10 + $0x28] sm:$0xf]
    %v946 = vld [vmem:[#allocation10 + $0x2c] sm:$0xf]
    %v947 = vld [vmem:[#allocation10 + $0x30] sm:$0xf]
    %v948 = vld [vmem:[#allocation10 + $0x34] sm:$0xf]
    %v949 = vld [vmem:[#allocation10 + $0x38] sm:$0xf]
    %v950 = vld [vmem:[#allocation10 + $0x3c] sm:$0xf]
    %v951 = vld [vmem:[%s8] sm:$0x1]
    %v953 = vperm.slane %v951, 0
    %v971 = vunpack.c.l.b16 %v935
    %v972 = vunpack.c.l.b16 %v936
    %v973 = vunpack.c.l.b16 %v937
    %v974 = vunpack.c.l.b16 %v938
    %v975 = vunpack.c.l.b16 %v939
    %v976 = vunpack.c.l.b16 %v940
    %v977 = vunpack.c.l.b16 %v941
    %v978 = vunpack.c.l.b16 %v942
    %v979 = vunpack.c.l.b16 %v943
    %v980 = vunpack.c.l.b16 %v944
    %v981 = vunpack.c.l.b16 %v945
    %v982 = vunpack.c.l.b16 %v946
    %v983 = vunpack.c.l.b16 %v947
    %v984 = vunpack.c.l.b16 %v948
    %v985 = vunpack.c.l.b16 %v949
    %v986 = vunpack.c.l.b16 %v950
    %v987 = vpack.c.b16 %v972, %v971
    %v988 = vpack.c.b16 %v974, %v973
    %v989 = vpack.c.b16 %v976, %v975
    %v990 = vpack.c.b16 %v978, %v977
    %v991 = vpack.c.b16 %v980, %v979
    %v992 = vpack.c.b16 %v982, %v981
    %v993 = vpack.c.b16 %v984, %v983
    %v994 = vpack.c.b16 %v986, %v985
    %1003 = vmatpush.bf16.msra.mxu0 %v994
    %1004 = vmatpush.bf16.msra.mxu0 %v993
    %1005 = vmatpush.bf16.msra.mxu0 %v992
    %1006 = vmatpush.bf16.msra.mxu0 %v991
    %1007 = vmatpush.bf16.msra.mxu0 %v990
    %1008 = vmatpush.bf16.msra.mxu0 %v989
    %1009 = vmatpush.bf16.msra.mxu0 %v988
    %1010 = vmatpush.bf16.msra.mxu0 %v987
    %1011 = vmatmul.bf16.gmra.mxu0 %v934
    %v1012 = vpop.f32.mrf.mxu0
    %v1013 = vadd.f32 %v953, %v1012
    %v1014 = vpop.f32.mrf.mxu0
    %1015 = vdwg.mxu0
    %v1016 = vmax.f32 %v1013, 0.0
    %v1017 = vpack.c.bf16 %v1016, %v1016
    %v1018 = vld [vmem:[#allocation11] sm:$0xf]
    %v1019 = vld [vmem:[#allocation11 + $0x4] sm:$0xf]
    %v1020 = vld [vmem:[#allocation11 + $0x8] sm:$0xf]
    %v1021 = vld [vmem:[#allocation11 + $0xc] sm:$0xf]
    %v1022 = vld [vmem:[#allocation11 + $0x10] sm:$0xf]
    %v1023 = vld [vmem:[#allocation11 + $0x14] sm:$0xf]
    %v1024 = vld [vmem:[#allocation11 + $0x18] sm:$0xf]
    %v1025 = vld [vmem:[#allocation11 + $0x1c] sm:$0xf]
    %v1026 = vld [vmem:[#allocation11 + $0x20] sm:$0xf]
    %v1027 = vld [vmem:[#allocation11 + $0x24] sm:$0xf]
    %v1028 = vld [vmem:[#allocation11 + $0x28] sm:$0xf]
    %v1029 = vld [vmem:[#allocation11 + $0x2c] sm:$0xf]
    %v1030 = vld [vmem:[#allocation11 + $0x30] sm:$0xf]
    %v1031 = vld [vmem:[#allocation11 + $0x34] sm:$0xf]
    %v1032 = vld [vmem:[#allocation11 + $0x38] sm:$0xf]
    %v1033 = vld [vmem:[#allocation11 + $0x3c] sm:$0xf]
    %v1034 = vld [vmem:[%s10] sm:$0x1]
    %v1036 = vperm.slane %v1034, 0
    %v1054 = vunpack.c.l.b16 %v1018
    %v1055 = vunpack.c.l.b16 %v1019
    %v1056 = vunpack.c.l.b16 %v1020
    %v1057 = vunpack.c.l.b16 %v1021
    %v1058 = vunpack.c.l.b16 %v1022
    %v1059 = vunpack.c.l.b16 %v1023
    %v1060 = vunpack.c.l.b16 %v1024
    %v1061 = vunpack.c.l.b16 %v1025
    %v1062 = vunpack.c.l.b16 %v1026
    %v1063 = vunpack.c.l.b16 %v1027
    %v1064 = vunpack.c.l.b16 %v1028
    %v1065 = vunpack.c.l.b16 %v1029
    %v1066 = vunpack.c.l.b16 %v1030
    %v1067 = vunpack.c.l.b16 %v1031
    %v1068 = vunpack.c.l.b16 %v1032
    %v1069 = vunpack.c.l.b16 %v1033
    %v1070 = vpack.c.b16 %v1055, %v1054
    %v1071 = vpack.c.b16 %v1057, %v1056
    %v1072 = vpack.c.b16 %v1059, %v1058
    %v1073 = vpack.c.b16 %v1061, %v1060
    %v1074 = vpack.c.b16 %v1063, %v1062
    %v1075 = vpack.c.b16 %v1065, %v1064
    %v1076 = vpack.c.b16 %v1067, %v1066
    %v1077 = vpack.c.b16 %v1069, %v1068
    %1086 = vmatpush.bf16.msra.mxu0 %v1077
    %1087 = vmatpush.bf16.msra.mxu0 %v1076
    %1088 = vmatpush.bf16.msra.mxu0 %v1075
    %1089 = vmatpush.bf16.msra.mxu0 %v1074
    %1090 = vmatpush.bf16.msra.mxu0 %v1073
    %1091 = vmatpush.bf16.msra.mxu0 %v1072
    %1092 = vmatpush.bf16.msra.mxu0 %v1071
    %1093 = vmatpush.bf16.msra.mxu0 %v1070
    %1094 = vmatmul.bf16.gmra.mxu0 %v1017
    %v1095 = vpop.f32.mrf.mxu0
    %v1096 = vadd.f32 %v1036, %v1095
    %v1097 = vpop.f32.mrf.mxu0
    %1098 = vdwg.mxu0
    %v1099 = vsub.f32 0.0, %v1096
    %v1100 = vmul.f32 %v1099, 1.442695
    %v1101 = vpow.pop %v1100
    %v1102 = vadd.f32 %v1101, 1.0
    %v1103 = vrcp.pop %v1102
    %v1104 = vmax.f32 %v1103, 0.0
    %v1105 = vmin.f32 %v1104, 1.0
    %1106 = vst [vmem:[#allocation13] sm:$0xff] %v1105
    // Predicated region
    $region70: #{tpu_custom_call.1} parent=1 // pred_check
      _
    $region71: #{tpu_custom_call.1} parent=1 // pred_check_branch
      %1108 = sbr.rel (0) target = $region73
    $region72: #{tpu_custom_call.1} parent=1 // pred_region
      %1110 = vsyncadd [#allocation4], 0
      %s1112 = sshll.u32 [#allocation13], 4
      %s1113 = int_to_ptr.vmem [resolvable:$true] %s1112
      %s1114 = sshll.u32 %s11, 4
      %s1115 = int_to_ptr.hbm [resolvable:$true] %s1114
      %1117 = dma.vmem_to_hbm [thread:$0]  %s1113, 128, %s1115, [#allocation4]
    $region73: #{tpu_custom_call.1} parent=1 // pred_fallthru
      _
    // Predicated region
    $region74: #{tpu_custom_call.1} parent=1 // pred_check
      _
    $region75: #{tpu_custom_call.1} parent=1 // pred_check_branch
      %1119 = sbr.rel (0) target = $region77
    $region76: #{tpu_custom_call.1} parent=1 // pred_region
      %1121 = dma.done [#allocation4], 128
    $region77: #{tpu_custom_call.1} parent=1 // pred_fallthru
      _
    %1122 = vsyncpa [#allocation3], 1
    %1123 = vsyncpa [#allocation6], 1
    %1124 = vsyncpa [#allocation9], 1
    %1125 = vsyncpa [#allocation12], 1
    %1126 = vsyncpa [#allocation4], 1

</llo_original>
